<compile_context>
chip_gen: v7x
topology: tpu7x:2x2x1
jax: 0.10.0
libtpu: 0.0.40
codegen_flags: <defaults>
</compile_context>

<pallas_src>
import functools

import jax
import jax.numpy as jnp
from jax.experimental import pallas as pl
from jax.experimental.pallas import tpu as pltpu


def _round_up(x, m):
    return ((x + m - 1) // m) * m


def _gc_block_kernel(x_cur_ref, x_nxt_ref, w_ref, b_ref, col_ref, o_ref,
                     win_ref, patch_ref, *, k, nc, ncp, ny, t_hw,
                     use_act, neg_slope):
    """One (batch, spatial-tile) grid step.

    x_cur_ref : (1, nc, t_hw)     flat row-padded input, this tile
    x_nxt_ref : (1, nc, t_hw)     flat row-padded input, next tile (halo)
    w_ref     : (1, co, k*k*ncp)  per-batch weights, tap-major, ch zero-padded
    b_ref     : (1, co, 1)        per-batch bias (f32)
    col_ref   : (1, t_hw)         image-column index of each output pixel
    o_ref     : (1, co, t_hw)     output tile (lane-dense on flattened H*W)
    win_ref   : (ncp, 2*t_hw)     staging window (current tile + halo)  scratch
    patch_ref : (k*k*ncp, t_hw)   im2col patch matrix                   scratch
    """
    p = k // 2

    # Channel-pad rows of the window multiply against zero weights, but keep
    # them zeroed so stale VMEM (possibly NaN) never reaches the MXU (0*NaN).
    if ncp > nc:
        win_ref[nc:, :] = jnp.zeros((ncp - nc, 2 * t_hw), dtype=win_ref.dtype)

    # Stage the current tile and the next tile (halo source) contiguously.
    win_ref[0:nc, 0:t_hw] = x_cur_ref[0]
    win_ref[0:nc, t_hw:2 * t_hw] = x_nxt_ref[0]

    col = col_ref[...]  # (1, t_hw) int32

    # In-VMEM im2col: tap (dy, dx) of the row-padded, row-major-flattened
    # image is a constant flat shift of dy*ny + dx (static lane slice, XLU).
    # Horizontal zero padding is applied as a per-tap column-validity mask.
    t_idx = 0
    for dy in range(k):
        for dx in range(k):
            off = dy * ny + dx
            slab = win_ref[:, off:off + t_hw]            # (ncp, t_hw)
            lo = p - dx                                   # valid image columns
            hi = ny - 1 + p - dx                          # for this dx
            if lo > 0:
                slab = jnp.where(col >= lo, slab, jnp.zeros_like(slab))
            if hi < ny - 1:
                slab = jnp.where(col <= hi, slab, jnp.zeros_like(slab))
            patch_ref[ncp * t_idx:ncp * (t_idx + 1), :] = slab
            t_idx += 1

    # One fused MXU matmul for all taps and channels, f32 accumulation.
    acc = jnp.dot(w_ref[0], patch_ref[...], preferred_element_type=jnp.float32)
    acc = acc + b_ref[0]                                  # (co, 1) broadcast
    if use_act:
        acc = jnp.where(acc >= 0, acc, neg_slope * acc)   # F.leaky_relu default
    o_ref[0] = acc.astype(o_ref.dtype)


def _pick_hw_tile(hw, halo_len, max_tile):
    """Lane tile (multiple of 128, >= flat halo) for the flattened H*W axis."""
    min_tile = _round_up(max(halo_len, 128), 128)
    cap = max(min_tile, (max_tile // 128) * 128)
    if hw <= cap:
        return max(_round_up(hw, 128), min_tile)
    if hw % 128 == 0:
        t = cap
        while t >= min_tile:
            if hw % t == 0:
                return t
            t -= 128
    return cap  # does not divide hw: pad hw up in the wrapper


def gc_replay_nonlin_block(x, weight, bias, k, *,
                           compute_dtype=jnp.bfloat16,
                           out_dtype=None,
                           use_act=True,
                           max_tile=None):
    """Pallas forward.

    x      : [nb, nc, nx, ny]             (NCHW, like the PyTorch module)
    weight : [nb, out_channel, nc, k, k]  (per-batch group-conv kernels)
    bias   : [nb, out_channel]
    returns: [nb, out_channel, nx, ny]
    """
    nb, nc, nx, ny = x.shape
    co = weight.shape[1]
    assert weight.shape == (nb, co, nc, k, k)
    p = k // 2
    hw = nx * ny
    out_dtype = x.dtype if out_dtype is None else out_dtype
    compute_dtype = x.dtype if compute_dtype is None else compute_dtype
    if max_tile is None:
        max_tile = 32768 if jnp.dtype(compute_dtype).itemsize <= 2 else 16384

    halo_len = (k - 1) * (ny + 1)            # largest flat tap shift
    t_hw = _pick_hw_tile(hw, halo_len, max_tile)
    n_hw = pl.cdiv(hw, t_hw)
    hwp = n_hw * t_hw                        # padded output length
    lf = (n_hw + 1) * t_hw                   # flat input length incl. halo tile

    ncp = _round_up(nc, 8)                   # per-tap channel group (sublane tile)
    kp = k * k * ncp

    # ---- cheap glue (raw-input-sized streams, no k*k im2col blow-up) ----
    xc = x.astype(compute_dtype)
    # zero-pad rows only (vertical halo), flatten row-major, shift right by p
    # so every tap becomes a non-negative constant flat shift of dy*ny + dx.
    x_rows = jnp.pad(xc, ((0, 0), (0, 0), (p, p), (0, 0)))
    x_flat = x_rows.reshape(nb, nc, (nx + 2 * p) * ny)
    tail = lf - p - (nx + 2 * p) * ny
    xf = jnp.pad(x_flat, ((0, 0), (0, 0), (p, tail)))

    # weights -> (nb, co, k*k*ncp): tap-major, channels zero-padded to ncp
    w_taps = jnp.transpose(weight, (0, 1, 3, 4, 2))            # (nb,co,k,k,nc)
    w_taps = jnp.pad(w_taps, ((0, 0),) * 4 + ((0, ncp - nc),))
    w_flat = w_taps.reshape(nb, co, kp).astype(compute_dtype)

    b_r = bias.reshape(nb, co, 1).astype(jnp.float32)
    col = (jnp.arange(hwp, dtype=jnp.int32) % ny).reshape(1, hwp)

    kernel = functools.partial(
        _gc_block_kernel, k=k, nc=nc, ncp=ncp, ny=ny, t_hw=t_hw,
        use_act=use_act, neg_slope=0.01)

    flops = 2 * nb * co * nc * k * k * hw
    bytes_accessed = (xf.size * xf.dtype.itemsize
                      + w_flat.size * w_flat.dtype.itemsize
                      + b_r.size * 4 + col.size * 4
                      + nb * co * hwp * jnp.dtype(out_dtype).itemsize)

    out = pl.pallas_call(
        kernel,
        out_shape=jax.ShapeDtypeStruct((nb, co, hwp), out_dtype),
        grid=(nb, n_hw),
        in_specs=[
            pl.BlockSpec((1, nc, t_hw), lambda b, j: (b, 0, j)),
            pl.BlockSpec((1, nc, t_hw), lambda b, j: (b, 0, j + 1)),   # halo
            pl.BlockSpec((1, co, kp), lambda b, j: (b, 0, 0)),
            pl.BlockSpec((1, co, 1), lambda b, j: (b, 0, 0)),
            pl.BlockSpec((1, t_hw), lambda b, j: (0, j)),
        ],
        out_specs=pl.BlockSpec((1, co, t_hw), lambda b, j: (b, 0, j)),
        scratch_shapes=[
            pltpu.VMEM((ncp, 2 * t_hw), compute_dtype),    # staging window
            pltpu.VMEM((kp, t_hw), compute_dtype),         # patch matrix
        ],
        compiler_params=pltpu.CompilerParams(
            dimension_semantics=("parallel", "parallel"),
            vmem_limit_bytes=48 * 1024 * 1024),
        cost_estimate=pl.CostEstimate(
            flops=flops, transcendentals=0, bytes_accessed=bytes_accessed),
    )(xf, xf, w_flat, b_r, col)

    if hwp != hw:                 # hw not 128-aligned: drop the tail padding
        out = out[:, :, :hw]
    return out.reshape(nb, co, nx, ny)   # free reshape back to NCHW


def _reference_forward(x, weight, bias, k, use_act=True):
    """Pure-JAX reference (grouped conv done per batch element)."""
    nb = x.shape[0]
    p = k // 2
    outs = []
    for b in range(nb):
        o = jax.lax.conv_general_dilated(
            x[b:b + 1], weight[b],
            window_strides=(1, 1),
            padding=[(p, p), (p, p)],
            dimension_numbers=("NCHW", "OIHW", "NCHW"))
        o = o + bias[b][None, :, None, None]
        outs.append(o)
    out = jnp.concatenate(outs, axis=0)
    if use_act:
        out = jnp.where(out >= 0, out, 0.01 * out)
    return out


if __name__ == "__main__":
    # module defaults: in_channel=3, out_channel=32, kernel_pool=[1, 3]
    nb, nc, nx, ny = 2, 3, 16, 16
    out_channel = 32

    key = jax.random.PRNGKey(0)
    kx, kw1, kw3, kb = jax.random.split(key, 4)

    x = jax.random.normal(kx, (nb, nc, nx, ny), dtype=jnp.float32)
    weights = {
        1: jax.random.normal(kw1, (nb, out_channel, nc, 1, 1), dtype=jnp.float32),
        3: jax.random.normal(kw3, (nb, out_channel, nc, 3, 3), dtype=jnp.float32),
    }
    bias = jax.random.normal(kb, (nb, out_channel), dtype=jnp.float32)

    for k in (1, 3):  # kernel_pool=[1, 3]
        # f32 compute path: tight check against the f32 reference
        out32 = jax.block_until_ready(
            gc_replay_nonlin_block(x, weights[k], bias, k,
                                   compute_dtype=jnp.float32))
        ref32 = _reference_forward(x, weights[k], bias, k)
        assert out32.shape == (nb, out_channel, nx, ny)
        assert jnp.allclose(out32, ref32, atol=1e-4, rtol=1e-4), (
            f"f32 mismatch for k={k}: max err "
            f"{float(jnp.max(jnp.abs(out32 - ref32)))}")

        # default bf16-input path: compare against the reference evaluated on
        # bf16-quantized inputs (accumulation stays f32 in both).
        outbf = jax.block_until_ready(
            gc_replay_nonlin_block(x, weights[k], bias, k))
        xq = x.astype(jnp.bfloat16).astype(jnp.float32)
        wq = weights[k].astype(jnp.bfloat16).astype(jnp.float32)
        refbf = _reference_forward(xq, wq, bias, k)
        assert outbf.shape == (nb, out_channel, nx, ny)
        assert jnp.allclose(outbf, refbf, atol=2e-2, rtol=2e-2), (
            f"bf16 mismatch for k={k}: max err "
            f"{float(jnp.max(jnp.abs(outbf - refbf)))}")

    print("KERNEL_OK")
</pallas_src>

<mosaic_0001>
module attributes {stable_mosaic.version = 11 : i64} {
  func.func @_gc_block_kernel(%arg0: i32, %arg1: i32, %arg2: memref<1x3x256xf32, #tpu.memory_space<vmem>>, %arg3: memref<1x3x256xf32, #tpu.memory_space<vmem>>, %arg4: memref<1x32x8xf32, #tpu.memory_space<vmem>>, %arg5: memref<1x32x1xf32, #tpu.memory_space<vmem>>, %arg6: memref<1x256xi32, #tpu.memory_space<vmem>>, %arg7: memref<1x32x256xf32, #tpu.memory_space<vmem>>, %arg8: memref<8x512xf32, #tpu.memory_space<vmem>>, %arg9: memref<8x256xf32, #tpu.memory_space<vmem>>) attributes {dimension_semantics = [#tpu.dimension_semantics<parallel>, #tpu.dimension_semantics<parallel>], iteration_bounds = array<i64: 2, 1>, scalar_prefetch = 0 : i64, scratch_operands = 2 : i64, tpu.core_type = #tpu.core_type<tc>, window_params = [{transform_indices = @transform_0, window_bounds = array<i64: 1, 3, 256>}, {transform_indices = @transform_1, window_bounds = array<i64: 1, 3, 256>}, {transform_indices = @transform_2, window_bounds = array<i64: 1, 32, 8>}, {transform_indices = @transform_3, window_bounds = array<i64: 1, 32, 1>}, {transform_indices = @transform_4, window_bounds = array<i64: 1, 256>}, {transform_indices = @transform_5, window_bounds = array<i64: 1, 32, 256>}]} {
    %cst = arith.constant 0.000000e+00 : f32
    %0 = vector.broadcast %cst : f32 to vector<5x512xf32>
    %c3 = arith.constant 3 : index
    %c0 = arith.constant 0 : index
    %1 = vector.load %arg8[%c3, %c0] : memref<8x512xf32, #tpu.memory_space<vmem>>, vector<5x512xf32>
    tpu.vector_store %arg8[%c3, %c0], %0 {strides = array<i32>} : memref<8x512xf32, #tpu.memory_space<vmem>>, vector<5x512xf32>,
    %c0_0 = arith.constant 0 : index
    %c0_1 = arith.constant 0 : index
    %c0_2 = arith.constant 0 : index
    %2 = vector.load %arg2[%c0_0, %c0_1, %c0_2] : memref<1x3x256xf32, #tpu.memory_space<vmem>>, vector<1x3x256xf32>
    %3 = vector.shape_cast %2 : vector<1x3x256xf32> to vector<3x256xf32>
    %c0_3 = arith.constant 0 : index
    %c0_4 = arith.constant 0 : index
    %4 = vector.load %arg8[%c0_3, %c0_4] : memref<8x512xf32, #tpu.memory_space<vmem>>, vector<3x256xf32>
    tpu.vector_store %arg8[%c0_3, %c0_4], %3 {strides = array<i32>} : memref<8x512xf32, #tpu.memory_space<vmem>>, vector<3x256xf32>,
    %c0_5 = arith.constant 0 : index
    %c0_6 = arith.constant 0 : index
    %c0_7 = arith.constant 0 : index
    %5 = vector.load %arg3[%c0_5, %c0_6, %c0_7] : memref<1x3x256xf32, #tpu.memory_space<vmem>>, vector<1x3x256xf32>
    %6 = vector.shape_cast %5 : vector<1x3x256xf32> to vector<3x256xf32>
    %c0_8 = arith.constant 0 : index
    %c256 = arith.constant 256 : index
    %7 = vector.load %arg8[%c0_8, %c256] : memref<8x512xf32, #tpu.memory_space<vmem>>, vector<3x256xf32>
    tpu.vector_store %arg8[%c0_8, %c256], %6 {strides = array<i32>} : memref<8x512xf32, #tpu.memory_space<vmem>>, vector<3x256xf32>,
    %c0_9 = arith.constant 0 : index
    %c0_10 = arith.constant 0 : index
    %8 = vector.load %arg8[%c0_9, %c0_10] : memref<8x512xf32, #tpu.memory_space<vmem>>, vector<8x256xf32>
    %c0_11 = arith.constant 0 : index
    %c0_12 = arith.constant 0 : index
    %9 = vector.load %arg9[%c0_11, %c0_12] : memref<8x256xf32, #tpu.memory_space<vmem>>, vector<8x256xf32>
    tpu.vector_store %arg9[%c0_11, %c0_12], %8 {strides = array<i32>} : memref<8x256xf32, #tpu.memory_space<vmem>>, vector<8x256xf32>,
    %c0_13 = arith.constant 0 : index
    %c0_14 = arith.constant 0 : index
    %c0_15 = arith.constant 0 : index
    %10 = vector.load %arg4[%c0_13, %c0_14, %c0_15] : memref<1x32x8xf32, #tpu.memory_space<vmem>>, vector<1x32x8xf32>
    %11 = vector.shape_cast %10 : vector<1x32x8xf32> to vector<32x8xf32>
    %c0_16 = arith.constant 0 : index
    %c0_17 = arith.constant 0 : index
    %12 = vector.load %arg9[%c0_16, %c0_17] : memref<8x256xf32, #tpu.memory_space<vmem>>, vector<8x256xf32>
    %cst_18 = arith.constant dense<0.000000e+00> : vector<32x256xf32>
    %13 = tpu.matmul %11, %12, %cst_18 {dimension_numbers = #tpu.dot_dimension_numbers<[1], [0], [0], [1], [0, 0, 1, 1], [], []>} : vector<32x8xf32>, vector<8x256xf32>, vector<32x256xf32> -> vector<32x256xf32>
    %c0_19 = arith.constant 0 : index
    %c0_20 = arith.constant 0 : index
    %c0_21 = arith.constant 0 : index
    %14 = vector.load %arg5[%c0_19, %c0_20, %c0_21] : memref<1x32x1xf32, #tpu.memory_space<vmem>>, vector<1x32x1xf32>
    %15 = vector.shape_cast %14 : vector<1x32x1xf32> to vector<32x1xf32>
    %16 = vector.broadcast %15 : vector<32x1xf32> to vector<32x256xf32>
    %17 = arith.addf %13, %16 : vector<32x256xf32>
    %cst_22 = arith.constant 0.000000e+00 : f32
    %18 = vector.broadcast %cst_22 : f32 to vector<32x256xf32>
    %19 = arith.cmpf oge, %17, %18 : vector<32x256xf32>
    %cst_23 = arith.constant 0.00999999977 : f32
    %20 = vector.broadcast %cst_23 : f32 to vector<32x256xf32>
    %21 = arith.mulf %20, %17 : vector<32x256xf32>
    %22 = arith.select %19, %17, %21 : vector<32x256xi1>, vector<32x256xf32>
    %c0_24 = arith.constant 0 : index
    %c0_25 = arith.constant 0 : index
    %c0_26 = arith.constant 0 : index
    %23 = vector.load %arg7[%c0_24, %c0_25, %c0_26] : memref<1x32x256xf32, #tpu.memory_space<vmem>>, vector<1x32x256xf32>
    %24 = vector.shape_cast %23 : vector<1x32x256xf32> to vector<32x256xf32>
    %25 = vector.shape_cast %22 : vector<32x256xf32> to vector<1x32x256xf32>
    tpu.vector_store %arg7[%c0_24, %c0_25, %c0_26], %25 {strides = array<i32>} : memref<1x32x256xf32, #tpu.memory_space<vmem>>, vector<1x32x256xf32>,
    return
  }
  func.func @transform_0(%arg0: i32, %arg1: i32) -> (i32, i32, i32) {
    %c0_i32 = arith.constant 0 : i32
    %c0_i32_0 = arith.constant 0 : i32
    return %arg0, %c0_i32, %arg1 : i32, i32, i32
  }
  func.func @transform_1(%arg0: i32, %arg1: i32) -> (i32, i32, i32) {
    %c1_i32 = arith.constant 1 : i32
    %0 = arith.addi %arg1, %c1_i32 : i32
    %c0_i32 = arith.constant 0 : i32
    %c0_i32_0 = arith.constant 0 : i32
    return %arg0, %c0_i32, %0 : i32, i32, i32
  }
  func.func @transform_2(%arg0: i32, %arg1: i32) -> (i32, i32, i32) {
    %c0_i32 = arith.constant 0 : i32
    %c0_i32_0 = arith.constant 0 : i32
    %c0_i32_1 = arith.constant 0 : i32
    return %arg0, %c0_i32, %c0_i32_0 : i32, i32, i32
  }
  func.func @transform_3(%arg0: i32, %arg1: i32) -> (i32, i32, i32) {
    %c0_i32 = arith.constant 0 : i32
    %c0_i32_0 = arith.constant 0 : i32
    %c0_i32_1 = arith.constant 0 : i32
    return %arg0, %c0_i32, %c0_i32_0 : i32, i32, i32
  }
  func.func @transform_4(%arg0: i32, %arg1: i32) -> (i32, i32) {
    %c0_i32 = arith.constant 0 : i32
    %c0_i32_0 = arith.constant 0 : i32
    return %c0_i32, %arg1 : i32, i32
  }
  func.func @transform_5(%arg0: i32, %arg1: i32) -> (i32, i32, i32) {
    %c0_i32 = arith.constant 0 : i32
    %c0_i32_0 = arith.constant 0 : i32
    return %arg0, %c0_i32, %arg1 : i32, i32, i32
  }
}

</mosaic_0001>

<llo_original>
// kernel: tpu_custom_call.1
$region0: #{tpu_custom_call.1}
  #allocation0 [shape = 'u32[]', space=smem, size = 0x4, offset = 0x4, fixed_abs, tag = 'smem constant byte address 0x4 - core index']
  #allocation1 [shape = 'u32[144,128]{1,0:T(1,128)}', space=vmem, size = 0x12000, scoped, tag = 'internal scratch']
  #allocation2 [shape = 'f32[8,512]{1,0:T(8,128)}', space=vmem, size = 0x4000, scoped, tag = 'scratch operand']
  #allocation3 [shape = 'f32[8,256]{1,0:T(8,128)}', space=vmem, size = 0x2000, scoped, tag = 'scratch operand']
  %s0 = inlined_call_operand.vmem [shape: f32[2,3,512], index: 0, kind: input, shape index: {}]
  %s1 = inlined_call_operand.vmem [shape: f32[2,3,512], index: 1, kind: input, shape index: {}]
  %s2 = inlined_call_operand.vmem [shape: f32[2,32,8], index: 2, kind: input, shape index: {}]
  %s3 = inlined_call_operand.vmem [shape: f32[2,32,1], index: 3, kind: input, shape index: {}]
  %s4 = inlined_call_operand.vmem [shape: s32[1,256], index: 4, kind: input, shape index: {}]
  %s5 = inlined_call_operand.hbm [shape: f32[2,32,256], index: 5, kind: output, shape index: {}]
  %s6 = sld [smem:[#allocation0]]
  $region53: #{tpu_custom_call.1} parent=0
    _
  %s8 = ssub.s32 1, %s6
  %s9 = scalar_select 0, %s8, %s6
  $region1: #{tpu_custom_call.1} parent=0
    #allocation4 [shape = 'u8[65536]{0}', space=vmem, size = 0x10000, scoped, tag = 'output window, operand 0']
    #allocation5 [shape = 's32[2]{0}', space=sflag, size = 0x8, scoped, tag = 'scoped memory for tpu_custom_call.1']
    %10 = vsyncpa [#allocation5], 0
    %s11 = scalar_lea.sflag [#allocation5], 1
    %12 = vsyncpa %s11, 0
    loop: start=0, step=1, limit=4
    $region2: #{tpu_custom_call.1} parent=1 // loop_pre_header
      _
    $region3: #{tpu_custom_call.1} parent=1 // loop_header
      %s14 = sphi 0, %s18
      %p15 = scmp.ge.s32.totalorder %s14, 4
      %s21 = sphi 0, %s33
      %s22 = sphi 0, %s29
      %s23 = sphi 0, %s21
      %s24 = sphi 0, %s22
      %s25 = sphi 0, %s23
      %s26 = sphi 0, %s24
      %s38 = sphi 0, %s40
      %s41 = sphi 0, %s38
      %s42 = sphi 0, %s41
      %s58 = sphi 0, %s42
      %s68 = sphi 0, %s70
      %s71 = sphi 0, %s68
      %s72 = sphi 0, %s71
      %s88 = sphi 0, %s72
      %s94 = sphi 0, %s96
      %s97 = sphi 0, %s94
      %s98 = sphi 0, %s97
      %s114 = sphi 0, %s98
      %s120 = sphi 0, %s122
      %s123 = sphi 0, %s120
      %s124 = sphi 0, %s123
      %s140 = sphi 0, %s124
      %s146 = sphi 0, %s148
      %s149 = sphi 0, %s146
      %s150 = sphi 0, %s149
      %s166 = sphi 0, %s150
      %s174 = sphi 0, %s176
      %s177 = sphi 0, %s174
      %s178 = sphi 0, %s177
      %s194 = sphi 0, %s178
    $region4: #{tpu_custom_call.1} parent=1 // loop_header_branch
      %17 = sbr.rel (%p15) target = $region8
    $region5: #{tpu_custom_call.1} parent=1 // loop_body
      %s19 = ssub.s32 %s14, 1
      %s20 = ssub.s32 %s14, 2
      %s27 = sadd.s32 1, %s22
      %p28 = scmp.ge.s32.totalorder %s27, 1
      %s29 = scalar_select %p28, 0, %s27
      %s30 = sadd.s32 1, %s21
      %s31 = scalar_select %p28, %s30, %s21
      %p32 = scmp.ge.s32.totalorder %s31, 2
      %s33 = scalar_select %p32, 0, %s31
      %s34 = ssub.s32 %s21, %s33
      %s35 = ssub.s32 %s22, %s29
      %s36 = sor.u32 %s34, %s35
      %p37 = scmp.eq.s32.totalorder %s36, 0
      %s39 = sadd.s32 %s38, 1
      %s40 = scalar_select %p37, %s38, %s39
      %p43 = pneg %p37
      %p44 = scmp.eq.s32.totalorder %s14, 1
      %p45 = por %p43, %p44
      %p46 = scmp.ne.s32.totalorder %s38, %s41
      %p47 = scmp.eq.s32.totalorder %s14, 0
      %p48 = por %p46, %p47
      %p49 = scmp.ne.s32.totalorder %s38, %s41
      %p50 = scmp.eq.s32.totalorder %s19, 1
      %p51 = por %p49, %p50
      %p52 = scmp.ne.s32.totalorder %s41, %s42
      %p53 = scmp.eq.s32.totalorder %s19, 0
      %p54 = por %p52, %p53
      %p55 = scmp.ne.s32.totalorder %s41, %s42
      %p56 = scmp.eq.s32.totalorder %s20, 1
      %p57 = por %p55, %p56
      %p59 = scmp.ne.s32.totalorder %s42, %s58
      %p60 = scmp.eq.s32.totalorder %s20, 0
      %p61 = por %p59, %p60
      %s62 = sadd.s32 %s22, 1
      %s63 = sadd.s32 %s29, 1
      %s64 = ssub.s32 %s21, %s33
      %s65 = ssub.s32 %s62, %s63
      %s66 = sor.u32 %s64, %s65
      %p67 = scmp.eq.s32.totalorder %s66, 0
      %s69 = sadd.s32 %s68, 1
      %s70 = scalar_select %p67, %s68, %s69
      %p73 = pneg %p67
      %p74 = scmp.eq.s32.totalorder %s14, 1
      %p75 = por %p73, %p74
      %p76 = scmp.ne.s32.totalorder %s68, %s71
      %p77 = scmp.eq.s32.totalorder %s14, 0
      %p78 = por %p76, %p77
      %p79 = scmp.ne.s32.totalorder %s68, %s71
      %p80 = scmp.eq.s32.totalorder %s19, 1
      %p81 = por %p79, %p80
      %p82 = scmp.ne.s32.totalorder %s71, %s72
      %p83 = scmp.eq.s32.totalorder %s19, 0
      %p84 = por %p82, %p83
      %p85 = scmp.ne.s32.totalorder %s71, %s72
      %p86 = scmp.eq.s32.totalorder %s20, 1
      %p87 = por %p85, %p86
      %p89 = scmp.ne.s32.totalorder %s72, %s88
      %p90 = scmp.eq.s32.totalorder %s20, 0
      %p91 = por %p89, %p90
      %s92 = ssub.s32 %s21, %s33
      %p93 = scmp.eq.s32.totalorder %s92, 0
      %s95 = sadd.s32 %s94, 1
      %s96 = scalar_select %p93, %s94, %s95
      %p99 = pneg %p93
      %p100 = scmp.eq.s32.totalorder %s14, 1
      %p101 = por %p99, %p100
      %p102 = scmp.ne.s32.totalorder %s94, %s97
      %p103 = scmp.eq.s32.totalorder %s14, 0
      %p104 = por %p102, %p103
      %p105 = scmp.ne.s32.totalorder %s94, %s97
      %p106 = scmp.eq.s32.totalorder %s19, 1
      %p107 = por %p105, %p106
      %p108 = scmp.ne.s32.totalorder %s97, %s98
      %p109 = scmp.eq.s32.totalorder %s19, 0
      %p110 = por %p108, %p109
      %p111 = scmp.ne.s32.totalorder %s97, %s98
      %p112 = scmp.eq.s32.totalorder %s20, 1
      %p113 = por %p111, %p112
      %p115 = scmp.ne.s32.totalorder %s98, %s114
      %p116 = scmp.eq.s32.totalorder %s20, 0
      %p117 = por %p115, %p116
      %s118 = ssub.s32 %s21, %s33
      %p119 = scmp.eq.s32.totalorder %s118, 0
      %s121 = sadd.s32 %s120, 1
      %s122 = scalar_select %p119, %s120, %s121
      %p125 = pneg %p119
      %p126 = scmp.eq.s32.totalorder %s14, 1
      %p127 = por %p125, %p126
      %p128 = scmp.ne.s32.totalorder %s120, %s123
      %p129 = scmp.eq.s32.totalorder %s14, 0
      %p130 = por %p128, %p129
      %p131 = scmp.ne.s32.totalorder %s120, %s123
      %p132 = scmp.eq.s32.totalorder %s19, 1
      %p133 = por %p131, %p132
      %p134 = scmp.ne.s32.totalorder %s123, %s124
      %p135 = scmp.eq.s32.totalorder %s19, 0
      %p136 = por %p134, %p135
      %p137 = scmp.ne.s32.totalorder %s123, %s124
      %p138 = scmp.eq.s32.totalorder %s20, 1
      %p139 = por %p137, %p138
      %p141 = scmp.ne.s32.totalorder %s124, %s140
      %p142 = scmp.eq.s32.totalorder %s20, 0
      %p143 = por %p141, %p142
      %s144 = ssub.s32 %s22, %s29
      %p145 = scmp.eq.s32.totalorder %s144, 0
      %s147 = sadd.s32 %s146, 1
      %s148 = scalar_select %p145, %s146, %s147
      %p151 = pneg %p145
      %p152 = scmp.eq.s32.totalorder %s14, 1
      %p153 = por %p151, %p152
      %p154 = scmp.ne.s32.totalorder %s146, %s149
      %p155 = scmp.eq.s32.totalorder %s14, 0
      %p156 = por %p154, %p155
      %p157 = scmp.ne.s32.totalorder %s146, %s149
      %p158 = scmp.eq.s32.totalorder %s19, 1
      %p159 = por %p157, %p158
      %p160 = scmp.ne.s32.totalorder %s149, %s150
      %p161 = scmp.eq.s32.totalorder %s19, 0
      %p162 = por %p160, %p161
      %p163 = scmp.ne.s32.totalorder %s149, %s150
      %p164 = scmp.eq.s32.totalorder %s20, 1
      %p165 = por %p163, %p164
      %p167 = scmp.ne.s32.totalorder %s150, %s166
      %p168 = scmp.eq.s32.totalorder %s20, 0
      %p169 = por %p167, %p168
      %s170 = ssub.s32 %s21, %s33
      %s171 = ssub.s32 %s22, %s29
      %s172 = sor.u32 %s170, %s171
      %p173 = scmp.eq.s32.totalorder %s172, 0
      %s175 = sadd.s32 %s174, 1
      %s176 = scalar_select %p173, %s174, %s175
      %p179 = pneg %p173
      %p180 = scmp.eq.s32.totalorder %s14, 1
      %p181 = por %p179, %p180
      %p182 = scmp.ne.s32.totalorder %s174, %s177
      %p183 = scmp.eq.s32.totalorder %s14, 0
      %p184 = por %p182, %p183
      %p185 = scmp.ne.s32.totalorder %s174, %s177
      %p186 = scmp.eq.s32.totalorder %s19, 1
      %p187 = por %p185, %p186
      %p188 = scmp.ne.s32.totalorder %s177, %s178
      %p189 = scmp.eq.s32.totalorder %s19, 0
      %p190 = por %p188, %p189
      %p191 = scmp.ne.s32.totalorder %s177, %s178
      %p192 = scmp.eq.s32.totalorder %s20, 1
      %p193 = por %p191, %p192
      %p195 = scmp.ne.s32.totalorder %s178, %s194
      %p196 = scmp.eq.s32.totalorder %s20, 0
      %p197 = por %p195, %p196
      %p198 = scmp.le.s32.totalorder 1, %s14
      %p199 = scmp.lt.s32.totalorder %s14, 3
      %p200 = pnand %p198, %p199
      %p201 = pneg %p200
      // Predicated region
      $region9: #{tpu_custom_call.1} parent=5 // pred_check
        _
      $region10: #{tpu_custom_call.1} parent=5 // pred_check_branch
        %203 = sbr.rel (%p200) target = $region12
      $region11: #{tpu_custom_call.1} parent=5 // pred_region
        %s204 = ssub.s32 %s14, 1
        // Predicated region
        $region13: #{tpu_custom_call.1} parent=11 // pred_check
          %p205 = pneg %p162
        $region14: #{tpu_custom_call.1} parent=11 // pred_check_branch
          %207 = sbr.rel (%p205) target = $region16
        $region15: #{tpu_custom_call.1} parent=11 // pred_region
          %s208 = smul.u32 2, %s24
          %p209 = scmp.lt.s32.totalorder %s208, 1
          %s210 = scalar_select %p209, %s208, 1
          %s211 = scalar_lea.vmem %s4, %s210
          %s212 = smul.u32 2, %s24
        $region16: #{tpu_custom_call.1} parent=11 // pred_fallthru
          _
      $region12: #{tpu_custom_call.1} parent=5 // pred_fallthru
        _
      %p213 = scmp.lt.s32.totalorder %s14, 2
      // Predicated region
      $region17: #{tpu_custom_call.1} parent=5 // pred_check
        %p214 = pneg %p213
      $region18: #{tpu_custom_call.1} parent=5 // pred_check_branch
        %216 = sbr.rel (%p214) target = $region20
      $region19: #{tpu_custom_call.1} parent=5 // pred_region
        // Predicated region
        $region21: #{tpu_custom_call.1} parent=19 // pred_check
          %p217 = pneg %p48
        $region22: #{tpu_custom_call.1} parent=19 // pred_check_branch
          %219 = sbr.rel (%p217) target = $region24
        $region23: #{tpu_custom_call.1} parent=19 // pred_region
          %s220 = smul.u32 2, %s22
          %p221 = scmp.lt.s32.totalorder %s21, 1
          %s222 = scalar_select %p221, %s21, 1
          %p223 = scmp.lt.s32.totalorder %s220, 3
          %s224 = scalar_select %p223, %s220, 3
          %s225 = smul.addr %s222, 4
          %s226 = sadd.s32 %s224, %s225
          %s227 = smul.addr %s226, 4
          %s228 = scalar_lea.vmem %s0, %s227
          %s229 = smul.u32 2, %s22
        $region24: #{tpu_custom_call.1} parent=19 // pred_fallthru
          _
        // Predicated region
        $region25: #{tpu_custom_call.1} parent=19 // pred_check
          %p230 = pneg %p78
        $region26: #{tpu_custom_call.1} parent=19 // pred_check_branch
          %232 = sbr.rel (%p230) target = $region28
        $region27: #{tpu_custom_call.1} parent=19 // pred_region
          %s233 = sadd.s32 %s22, 1
          %s234 = smul.u32 2, %s233
          %p235 = scmp.lt.s32.totalorder %s21, 1
          %s236 = scalar_select %p235, %s21, 1
          %p237 = scmp.lt.s32.totalorder %s234, 3
          %s238 = scalar_select %p237, %s234, 3
          %s239 = smul.addr %s236, 4
          %s240 = sadd.s32 %s238, %s239
          %s241 = smul.addr %s240, 4
          %s242 = scalar_lea.vmem %s1, %s241
          %s243 = sadd.s32 %s22, 1
          %s244 = smul.u32 2, %s243
        $region28: #{tpu_custom_call.1} parent=19 // pred_fallthru
          _
        // Predicated region
        $region29: #{tpu_custom_call.1} parent=19 // pred_check
          %p245 = pneg %p104
        $region30: #{tpu_custom_call.1} parent=19 // pred_check_branch
          %247 = sbr.rel (%p245) target = $region32
        $region31: #{tpu_custom_call.1} parent=19 // pred_region
          %p248 = scmp.lt.s32.totalorder %s21, 1
          %s249 = scalar_select %p248, %s21, 1
          %s250 = smul.addr %s249, 4
          %s251 = smul.addr %s250, 8
          %s252 = scalar_lea.vmem %s2, %s251
        $region32: #{tpu_custom_call.1} parent=19 // pred_fallthru
          _
        // Predicated region
        $region33: #{tpu_custom_call.1} parent=19 // pred_check
          %p253 = pneg %p130
        $region34: #{tpu_custom_call.1} parent=19 // pred_check_branch
          %255 = sbr.rel (%p253) target = $region36
        $region35: #{tpu_custom_call.1} parent=19 // pred_region
          %p256 = scmp.lt.s32.totalorder %s21, 1
          %s257 = scalar_select %p256, %s21, 1
          %s258 = smul.addr %s257, 4
          %s259 = smul.addr %s258, 8
          %s260 = scalar_lea.vmem %s3, %s259
        $region36: #{tpu_custom_call.1} parent=19 // pred_fallthru
          _
      $region20: #{tpu_custom_call.1} parent=5 // pred_fallthru
        _
      %p261 = scmp.le.s32.totalorder 1, %s14
      %p262 = scmp.lt.s32.totalorder %s14, 3
      %p263 = pnand %p261, %p262
      %p264 = pneg %p263
      // Predicated region
      $region37: #{tpu_custom_call.1} parent=5 // pred_check
        _
      $region38: #{tpu_custom_call.1} parent=5 // pred_check_branch
        %266 = sbr.rel (%p263) target = $region40
      $region39: #{tpu_custom_call.1} parent=5 // pred_region
        %s267 = ssub.s32 %s14, 1
        %s268 = smul.u32 2, %s24
        %p269 = scmp.lt.s32.totalorder %s23, 1
        %s270 = scalar_select %p269, %s23, 1
        %p271 = scmp.lt.s32.totalorder %s268, 3
        %s272 = scalar_select %p271, %s268, 3
        %s273 = smul.addr %s270, 4
        %s274 = sadd.s32 %s272, %s273
        %s275 = smul.addr %s274, 4
        %s276 = scalar_lea.vmem %s0, %s275
        %p277 = pneg %p54
        %p278 = pneg %p51
        %s279 = sadd.s32 %s24, 1
        %s280 = smul.u32 2, %s279
        %p281 = scmp.lt.s32.totalorder %s23, 1
        %s282 = scalar_select %p281, %s23, 1
        %p283 = scmp.lt.s32.totalorder %s280, 3
        %s284 = scalar_select %p283, %s280, 3
        %s285 = smul.addr %s282, 4
        %s286 = sadd.s32 %s284, %s285
        %s287 = smul.addr %s286, 4
        %s288 = scalar_lea.vmem %s1, %s287
        %p289 = pneg %p84
        %p290 = pneg %p81
        %p291 = scmp.lt.s32.totalorder %s23, 1
        %s292 = scalar_select %p291, %s23, 1
        %s293 = smul.addr %s292, 4
        %s294 = smul.addr %s293, 8
        %s295 = scalar_lea.vmem %s2, %s294
        %p296 = pneg %p110
        %p297 = pneg %p107
        %p298 = scmp.lt.s32.totalorder %s23, 1
        %s299 = scalar_select %p298, %s23, 1
        %s300 = smul.addr %s299, 4
        %s301 = smul.addr %s300, 8
        %s302 = scalar_lea.vmem %s3, %s301
        %p303 = pneg %p136
        %p304 = pneg %p133
        %s305 = smul.u32 2, %s24
        %p306 = scmp.lt.s32.totalorder %s305, 1
        %s307 = scalar_select %p306, %s305, 1
        %s308 = scalar_lea.vmem %s4, %s307
        %p309 = pneg %p162
        %p310 = pneg %p159
        %p311 = pneg %p190
        %p312 = pneg %p187
        %s313 = sand.u32 %s177, 1
        %s314 = scalar_lea.sflag [#allocation5], %s313
        %s315 = sand.u32 %s177, 1
        %s316 = smul.addr %s315, 64
        %s317 = scalar_lea.vmem [#allocation4], %s316
        %s318 = smul.u32 2, %s24
        %p319 = scmp.lt.s32.totalorder %s23, 1
        %s320 = scalar_select %p319, %s23, 1
        %p321 = scmp.lt.s32.totalorder %s318, 3
        %s322 = scalar_select %p321, %s318, 3
        %s323 = smul.addr %s320, 4
        %s324 = sadd.s32 %s322, %s323
        %s325 = smul.addr %s324, 4
        %s326 = scalar_lea.vmem %s0, %s325
        %s327 = smul.u32 2, %s24
        %s328 = sadd.s32 %s24, 1
        %s329 = smul.u32 2, %s328
        %p330 = scmp.lt.s32.totalorder %s23, 1
        %s331 = scalar_select %p330, %s23, 1
        %p332 = scmp.lt.s32.totalorder %s329, 3
        %s333 = scalar_select %p332, %s329, 3
        %s334 = smul.addr %s331, 4
        %s335 = sadd.s32 %s333, %s334
        %s336 = smul.addr %s335, 4
        %s337 = scalar_lea.vmem %s1, %s336
        %s338 = sadd.s32 %s24, 1
        %s339 = smul.u32 2, %s338
        %p340 = scmp.lt.s32.totalorder %s23, 1
        %s341 = scalar_select %p340, %s23, 1
        %s342 = smul.addr %s341, 4
        %s343 = smul.addr %s342, 8
        %s344 = scalar_lea.vmem %s2, %s343
        %p345 = scmp.lt.s32.totalorder %s23, 1
        %s346 = scalar_select %p345, %s23, 1
        %s347 = smul.addr %s346, 4
        %s348 = smul.addr %s347, 8
        %s349 = scalar_lea.vmem %s3, %s348
        %s350 = smul.u32 2, %s24
        %p351 = scmp.lt.s32.totalorder %s350, 1
        %s352 = scalar_select %p351, %s350, 1
        %s353 = scalar_lea.vmem %s4, %s352
        %s354 = smul.u32 2, %s24
        %s355 = smul.u32 2, %s24
        %356 = vst [vmem:[#allocation2] sm:$0xf8] 0.0
        %357 = vst [vmem:[#allocation2 + $0x8] sm:$0xf8] 0.0
        %358 = vst [vmem:[#allocation2 + $0x10] sm:$0xf8] 0.0
        %359 = vst [vmem:[#allocation2 + $0x18] sm:$0xf8] 0.0
        %v360 = vld [vmem:[%s326] sm:$0x77]
        %v362 = vcombine.high %v360, %v360
        %364 = vst [vmem:[#allocation2] sm:$0x7] %v360
        %365 = vst [vmem:[#allocation2 + $0x8] sm:$0x7] %v362
        %v366 = vld [vmem:[%s337] sm:$0x77]
        %v368 = vcombine.high %v366, %v366
        %370 = vst [vmem:[#allocation2 + $0x10] sm:$0x7] %v366
        %371 = vst [vmem:[#allocation2 + $0x18] sm:$0x7] %v368
        %v372 = vld [vmem:[#allocation2] sm:$0xff]
        %v373 = vld [vmem:[#allocation2 + $0x8] sm:$0xff]
        %374 = vst [vmem:[#allocation3] sm:$0xff] %v372
        %375 = vst [vmem:[#allocation3 + $0x8] sm:$0xff] %v373
        %v376 = vld [vmem:[%s344] sm:$0xff]
        %v377 = vld [vmem:[%s344 + $0x8] sm:$0xff]
        %v378 = vld [vmem:[%s344 + $0x10] sm:$0xff]
        %v379 = vld [vmem:[%s344 + $0x18] sm:$0xff]
        %v380 = vld [vmem:[#allocation3] sm:$0xff]
        %v381 = vld [vmem:[#allocation3 + $0x8] sm:$0xff]
        %v382 = vld [vmem:[%s349] sm:$0xff]
        %v383 = vld [vmem:[%s349 + $0x8] sm:$0xff]
        %v384 = vld [vmem:[%s349 + $0x10] sm:$0xff]
        %v385 = vld [vmem:[%s349 + $0x18] sm:$0xff]
        %387 = vset.pattern.permute.xlu0 0
        %388 = vperm.xlu0 %387, %v382
        %v389 = vpop.permute.xlu0 %388
        %392 = vset.pattern.permute.xlu0 0
        %393 = vperm.xlu0 %392, %v383
        %v394 = vpop.permute.xlu0 %393
        %397 = vset.pattern.permute.xlu0 0
        %398 = vperm.xlu0 %397, %v384
        %v399 = vpop.permute.xlu0 %398
        %402 = vset.pattern.permute.xlu0 0
        %403 = vperm.xlu0 %402, %v385
        %v404 = vpop.permute.xlu0 %403
        %vm406 = vcmask 64512
        %v408 = vsel %vm406, %v376, 0
        %v411 = vsel %vm406, %v377, 0
        %v414 = vsel %vm406, %v378, 0
        %v417 = vsel %vm406, %v379, 0
        %419 = vmatprep.subr.mxu0 %v381
        %420 = vmatpush1.msra.mxu0 %v380
        %421 = vmatprep.subr.mxu0 0.0
        %422 = vmatpush1.msra.mxu0 0.0
        %423 = vmatprep.subr.mxu0 0.0
        %424 = vmatpush1.msra.mxu0 0.0
        %425 = vmatprep.subr.mxu0 0.0
        %426 = vmatpush1.msra.mxu0 0.0
        %427 = vmatprep.subr.mxu0 0.0
        %428 = vmatpush1.msra.mxu0 0.0
        %429 = vmatprep.subr.mxu0 0.0
        %430 = vmatpush1.msra.mxu0 0.0
        %431 = vmatprep.subr.mxu0 0.0
        %432 = vmatpush1.msra.mxu0 0.0
        %433 = vmatprep.subr.mxu0 0.0
        %434 = vmatpush1.msra.mxu0 0.0
        %435 = vmatprep.subr.mxu0 0.0
        %436 = vmatpush1.msra.mxu0 0.0
        %437 = vmatprep.subr.mxu0 0.0
        %438 = vmatpush1.msra.mxu0 0.0
        %439 = vmatprep.subr.mxu0 0.0
        %440 = vmatpush1.msra.mxu0 0.0
        %441 = vmatprep.subr.mxu0 0.0
        %442 = vmatpush1.msra.mxu0 0.0
        %443 = vmatprep.subr.mxu0 0.0
        %444 = vmatpush1.msra.mxu0 0.0
        %445 = vmatprep.subr.mxu0 0.0
        %446 = vmatpush1.msra.mxu0 0.0
        %447 = vmatprep.subr.mxu0 0.0
        %448 = vmatpush1.msra.mxu0 0.0
        %449 = vmatprep.subr.mxu0 0.0
        %450 = vmatpush1.msra.mxu0 0.0
        %451 = vmatprep.subr.mxu0 0.0
        %452 = vmatpush1.msra.mxu0 0.0
        %453 = vmatprep.subr.mxu0 0.0
        %454 = vmatpush1.msra.mxu0 0.0
        %455 = vmatprep.subr.mxu0 0.0
        %456 = vmatpush1.msra.mxu0 0.0
        %457 = vmatprep.subr.mxu0 0.0
        %458 = vmatpush1.msra.mxu0 0.0
        %459 = vmatprep.subr.mxu0 0.0
        %460 = vmatpush1.msra.mxu0 0.0
        %461 = vmatprep.subr.mxu0 0.0
        %462 = vmatpush1.msra.mxu0 0.0
        %463 = vmatprep.subr.mxu0 0.0
        %464 = vmatpush1.msra.mxu0 0.0
        %465 = vmatprep.subr.mxu0 0.0
        %466 = vmatpush1.msra.mxu0 0.0
        %467 = vmatprep.subr.mxu0 0.0
        %468 = vmatpush1.msra.mxu0 0.0
        %469 = vmatprep.subr.mxu0 0.0
        %470 = vmatpush1.msra.mxu0 0.0
        %471 = vmatprep.subr.mxu0 0.0
        %472 = vmatpush1.msra.mxu0 0.0
        %473 = vmatprep.subr.mxu0 0.0
        %474 = vmatpush1.msra.mxu0 0.0
        %475 = vmatprep.subr.mxu0 0.0
        %476 = vmatpush1.msra.mxu0 0.0
        %477 = vmatprep.subr.mxu0 0.0
        %478 = vmatpush1.msra.mxu0 0.0
        %479 = vmatprep.subr.mxu0 0.0
        %480 = vmatpush1.msra.mxu0 0.0
        %481 = vmatprep.subr.mxu0 0.0
        %482 = vmatpush1.msra.mxu0 0.0
        %483 = vmatprep.mubr.f32.mxu0 0.0
        %484 = vmatmul.mubr.f32.gmra.mrb[0].mxu0 %v408
        %v485 = vpop.f32.mrb[0].mxu0
        %v486 = vadd.f32 %v389, %v485
        %v487 = vpop.f32.mrb[0].mxu0
        %v488 = vadd.f32 %v389, %v487
        %489 = vmatprep.mubr.f32.mxu0 0.0
        %490 = vmatmul.mubr.f32.gmra.mrb[0].mxu0 %v411
        %v491 = vpop.f32.mrb[0].mxu0
        %v492 = vadd.f32 %v394, %v491
        %v493 = vpop.f32.mrb[0].mxu0
        %v494 = vadd.f32 %v394, %v493
        %495 = vmatprep.mubr.f32.mxu0 0.0
        %496 = vmatmul.mubr.f32.gmra.mrb[0].mxu0 %v414
        %v497 = vpop.f32.mrb[0].mxu0
        %v498 = vadd.f32 %v399, %v497
        %v499 = vpop.f32.mrb[0].mxu0
        %v500 = vadd.f32 %v399, %v499
        %501 = vmatprep.mubr.f32.mxu0 0.0
        %502 = vmatmul.mubr.f32.gmra.mrb[0].mxu0 %v417
        %v503 = vpop.f32.mrb[0].mxu0
        %v504 = vadd.f32 %v404, %v503
        %v505 = vpop.f32.mrb[0].mxu0
        %v506 = vadd.f32 %v404, %v505
        %507 = vdwg.mxu0
        %vm508 = vcmp.ge.f32.partialorder %v486, 0.0
        %vm509 = vcmp.ge.f32.partialorder %v488, 0.0
        %vm510 = vcmp.ge.f32.partialorder %v492, 0.0
        %vm511 = vcmp.ge.f32.partialorder %v494, 0.0
        %vm512 = vcmp.ge.f32.partialorder %v498, 0.0
        %vm513 = vcmp.ge.f32.partialorder %v500, 0.0
        %vm514 = vcmp.ge.f32.partialorder %v504, 0.0
        %vm515 = vcmp.ge.f32.partialorder %v506, 0.0
        %v516 = vmul.f32 %v486, 0.01
        %v517 = vmul.f32 %v488, 0.01
        %v518 = vmul.f32 %v492, 0.01
        %v519 = vmul.f32 %v494, 0.01
        %v520 = vmul.f32 %v498, 0.01
        %v521 = vmul.f32 %v500, 0.01
        %v522 = vmul.f32 %v504, 0.01
        %v523 = vmul.f32 %v506, 0.01
        %v524 = vsel %vm508, %v486, %v516
        %v525 = vsel %vm509, %v488, %v517
        %v526 = vsel %vm510, %v492, %v518
        %v527 = vsel %vm511, %v494, %v519
        %v528 = vsel %vm512, %v498, %v520
        %v529 = vsel %vm513, %v500, %v521
        %v530 = vsel %vm514, %v504, %v522
        %v531 = vsel %vm515, %v506, %v523
        %532 = vst [vmem:[%s317] sm:$0xff] %v524
        %533 = vst [vmem:[%s317 + $0x8] sm:$0xff] %v525
        %534 = vst [vmem:[%s317 + $0x10] sm:$0xff] %v526
        %535 = vst [vmem:[%s317 + $0x18] sm:$0xff] %v527
        %536 = vst [vmem:[%s317 + $0x20] sm:$0xff] %v528
        %537 = vst [vmem:[%s317 + $0x28] sm:$0xff] %v529
        %538 = vst [vmem:[%s317 + $0x30] sm:$0xff] %v530
        %539 = vst [vmem:[%s317 + $0x38] sm:$0xff] %v531
        %s540 = sand.u32 %s177, 1
        %s541 = scalar_lea.sflag [#allocation5], %s540
        %s542 = sand.u32 %s177, 1
        %s543 = smul.addr %s542, 64
        %s544 = scalar_lea.vmem [#allocation4], %s543
        // Predicated region
        $region41: #{tpu_custom_call.1} parent=39 // pred_check
          %p545 = pneg %p187
        $region42: #{tpu_custom_call.1} parent=39 // pred_check_branch
          %547 = sbr.rel (%p545) target = $region44
        $region43: #{tpu_custom_call.1} parent=39 // pred_region
          %s548 = smul.u32 2, %s24
          %s550 = ssub.s32 1024, 1024
          %551 = vsyncadd %s541, %s550
          %s552 = smul.addr %s23, 8
          %s553 = sadd.s32 %s548, %s552
          %s554 = smul.addr %s553, 128
          %s555 = scalar_lea.hbm %s5, %s554
          %s556 = sshll.u32 %s544, 4
          %s557 = int_to_ptr.vmem [resolvable:$true] %s556
          %562 = dma.vmem_to_hbm [thread:$0]  %s557, 1024, %s555, %s541, 256, 256, 16
        $region44: #{tpu_custom_call.1} parent=39 // pred_fallthru
          _
      $region40: #{tpu_custom_call.1} parent=5 // pred_fallthru
        _
      %p563 = scmp.le.s32.totalorder 2, %s14
      // Predicated region
      $region45: #{tpu_custom_call.1} parent=5 // pred_check
        %p564 = pneg %p563
      $region46: #{tpu_custom_call.1} parent=5 // pred_check_branch
        %566 = sbr.rel (%p564) target = $region48
      $region47: #{tpu_custom_call.1} parent=5 // pred_region
        %s567 = ssub.s32 %s14, 2
        // Predicated region
        $region49: #{tpu_custom_call.1} parent=47 // pred_check
          %p568 = pneg %p193
        $region50: #{tpu_custom_call.1} parent=47 // pred_check_branch
          %570 = sbr.rel (%p568) target = $region52
        $region51: #{tpu_custom_call.1} parent=47 // pred_region
          %s571 = sand.u32 %s178, 1
          %s572 = scalar_lea.sflag [#allocation5], %s571
          %s573 = sand.u32 %s178, 1
          %s574 = smul.addr %s573, 64
          %s575 = scalar_lea.vmem [#allocation4], %s574
          %576 = dma.done %s572, 1024
        $region52: #{tpu_custom_call.1} parent=47 // pred_fallthru
          _
      $region48: #{tpu_custom_call.1} parent=5 // pred_fallthru
        _
    $region6: #{tpu_custom_call.1} parent=1 // loop_footer
      %s18 = sadd.s32 1, %s14
    $region7: #{tpu_custom_call.1} parent=1 // loop_footer_branch
      %13 = sbr.rel target = $region3
    $region8: #{tpu_custom_call.1} parent=1 // loop_exit
      _
    %577 = vsyncpa [#allocation5], 1
    %s578 = scalar_lea.sflag [#allocation5], 1
    %579 = vsyncpa %s578, 1

</llo_original>
